<compile_context>
chip_gen: v7x
topology: tpu7x:2x2x1
jax: 0.10.0
libtpu: 0.0.40
codegen_flags: <defaults>
</compile_context>

<pallas_src>
import math

import jax
import jax.numpy as jnp
from jax.experimental import pallas as pl
from jax.experimental.pallas import tpu as pltpu


_TARGET_TILE_BYTES = 2 << 20    # ~2 MiB per x/out tile (amortizes grid-step overhead)
_VMEM_FLOOR = 32 << 20          # explicit limit: above v5e's 16 MiB scoped default
_VMEM_CEIL = 48 << 20           # stays safely inside v7x's 64 MiB physical VMEM


def _add_pe_kernel(x_ref, pe_ref, o_ref):
    # Pure VPU elementwise add; pe block has a leading 1 so jnp broadcasting
    # handles (tB, ..., D) + (1, ..., D).
    o_ref[...] = x_ref[...] + pe_ref[...]


def make_positional_encoding(d_model: int, max_steps: int,
                             dtype=jnp.float32) -> jnp.ndarray:
    """Builds the (1, max_steps, d_model) sinusoidal PE buffer (model dtype)."""
    position = jnp.arange(max_steps, dtype=jnp.float32)[:, None]          # (S, 1)
    div_term = jnp.exp(
        jnp.arange(0, d_model, 2, dtype=jnp.float32)
        * (-math.log(10000.0) / d_model)
    )                                                                      # (ceil(D/2),)
    sin_vals = jnp.sin(position * div_term)
    cos_vals = jnp.cos(position * div_term)
    pe = jnp.zeros((1, max_steps, d_model), dtype=jnp.float32)
    pe = pe.at[0, :, 0::2].set(sin_vals)
    pe = pe.at[0, :, 1::2].set(cos_vals[:, : d_model // 2])  # handles odd d_model
    return pe.astype(dtype)


def _pick_tile(full: int, granule: int, max_elems: int) -> int:
    """Tile size along one blocked dim: the whole dim if it fits, else the
    largest multiple of `granule` <= max_elems (at least `granule`).
    Full-dim blocks are always layout-legal; partial blocks must be a
    multiple of the packing granule and are masked at the cdiv boundary."""
    if full <= max_elems:
        return full
    return max(granule, (max_elems // granule) * granule)


def _vmem_limit(x_tile_bytes: int, pe_tile_bytes: int) -> int:
    # Double-buffered x + out + pe, plus headroom; clamped per-generation-safe.
    pipelined = 2 * (2 * x_tile_bytes + pe_tile_bytes)
    return int(min(_VMEM_CEIL, max(_VMEM_FLOOR, 2 * pipelined)))


def positional_encoding_forward(x: jnp.ndarray, pe: jnp.ndarray) -> jnp.ndarray:
    """x: (B, T, D); pe: (1, max_steps, D). Returns x + pe[:, :T]."""
    B, T, D = x.shape
    if T > pe.shape[1]:
        raise ValueError(f"sequence length {T} exceeds max_steps {pe.shape[1]}")
    if D != pe.shape[2]:
        raise ValueError("d_model mismatch between x and pe")

    # Slice / cast only when needed (pe should already be built in x.dtype).
    pe_s = pe if pe.shape[1] == T else pe[:, :T, :]
    if pe_s.dtype != x.dtype:
        pe_s = pe_s.astype(x.dtype)

    itemsize = jnp.dtype(x.dtype).itemsize
    sub = max(8, 32 // itemsize)              # sublane packing: 8 f32, 16 bf16, 32 i8
    elems_target = max(1, _TARGET_TILE_BYTES // itemsize)

    if D % 128 == 0:
        # ---- 3-D path: lane-dense already, no reshape -> alias is guaranteed.
        tT = _pick_tile(T, sub, max(sub, elems_target // D))
        tB = _pick_tile(B, 1, max(1, elems_target // (tT * D)))
        grid = (pl.cdiv(T, tT), pl.cdiv(B, tB))   # batch innermost: PE tile stays resident
        return pl.pallas_call(
            _add_pe_kernel,
            out_shape=jax.ShapeDtypeStruct((B, T, D), x.dtype),
            grid=grid,
            in_specs=[
                pl.BlockSpec((tB, tT, D), lambda t, b: (b, t, 0)),
                pl.BlockSpec((1, tT, D), lambda t, b: (0, t, 0)),  # broadcast over b
            ],
            out_specs=pl.BlockSpec((tB, tT, D), lambda t, b: (b, t, 0)),
            input_output_aliases={0: 0},
            compiler_params=pltpu.CompilerParams(
                dimension_semantics=("parallel", "parallel"),
                vmem_limit_bytes=_vmem_limit(tB * tT * D * itemsize,
                                             tT * D * itemsize)),
        )(x, pe_s)

    # ---- Lane-dense fold: D not a multiple of 128 would force masked partial
    # stores, so merge (T, D) into one trailing dim L = T*D per batch row.
    # (Reshape only merges trailing dims; if XLA cannot alias through it the
    # result is still correct, just not in-place.)
    L = T * D
    x2 = x.reshape(B, L)
    pe2 = pe_s.reshape(1, L)
    tL = _pick_tile(L, 128, max(128, elems_target))        # prefer whole lane rows
    tB = _pick_tile(B, sub, max(sub, elems_target // tL))
    grid = (pl.cdiv(L, tL), pl.cdiv(B, tB))                 # batch innermost again
    out2 = pl.pallas_call(
        _add_pe_kernel,
        out_shape=jax.ShapeDtypeStruct((B, L), x.dtype),
        grid=grid,
        in_specs=[
            pl.BlockSpec((tB, tL), lambda l, b: (b, l)),
            pl.BlockSpec((1, tL), lambda l, b: (0, l)),     # broadcast over b
        ],
        out_specs=pl.BlockSpec((tB, tL), lambda l, b: (b, l)),
        input_output_aliases={0: 0},
        compiler_params=pltpu.CompilerParams(
            dimension_semantics=("parallel", "parallel"),
            vmem_limit_bytes=_vmem_limit(tB * tL * itemsize, tL * itemsize)),
    )(x2, pe2)
    return out2.reshape(B, T, D)


if __name__ == "__main__":
    d_model = 32
    max_steps = 16
    batch = 2
    seq = 8  # seq <= max_steps, exercises the pe[:, :x.size(1)] slice

    key = jax.random.PRNGKey(0)
    x = jax.random.normal(key, (batch, seq, d_model), dtype=jnp.float32)
    pe = make_positional_encoding(d_model, max_steps, dtype=x.dtype)

    # Reference (pure JAX, same semantics as the PyTorch forward), computed
    # BEFORE the kernel call because x is donated to the jitted forward.
    ref = x + pe[:, :seq, :]

    fwd = jax.jit(positional_encoding_forward, donate_argnums=(0,))
    out = jax.block_until_ready(fwd(x, pe))

    assert out.shape == ref.shape
    assert jnp.allclose(out, ref, atol=1e-6, rtol=1e-6), "mismatch vs reference"
    print("KERNEL_OK")
</pallas_src>

<mosaic_0001>
module attributes {stable_mosaic.version = 11 : i64} {
  func.func @_add_pe_kernel(%arg0: i32, %arg1: i32, %arg2: memref<2x256xf32, #tpu.memory_space<vmem>>, %arg3: memref<1x256xf32, #tpu.memory_space<vmem>>, %arg4: memref<2x256xf32, #tpu.memory_space<vmem>>) attributes {dimension_semantics = [#tpu.dimension_semantics<parallel>, #tpu.dimension_semantics<parallel>], iteration_bounds = array<i64: 1, 1>, scalar_prefetch = 0 : i64, scratch_operands = 0 : i64, tpu.core_type = #tpu.core_type<tc>, window_params = [{transform_indices = @transform_0, window_bounds = array<i64: 2, 256>}, {transform_indices = @transform_1, window_bounds = array<i64: 1, 256>}, {transform_indices = @transform_2, window_bounds = array<i64: 2, 256>}]} {
    %c0 = arith.constant 0 : index
    %c0_0 = arith.constant 0 : index
    %0 = vector.load %arg2[%c0, %c0_0] : memref<2x256xf32, #tpu.memory_space<vmem>>, vector<2x256xf32>
    %c0_1 = arith.constant 0 : index
    %c0_2 = arith.constant 0 : index
    %1 = vector.load %arg3[%c0_1, %c0_2] : memref<1x256xf32, #tpu.memory_space<vmem>>, vector<1x256xf32>
    %2 = vector.broadcast %1 : vector<1x256xf32> to vector<2x256xf32>
    %3 = arith.addf %0, %2 : vector<2x256xf32>
    %c0_3 = arith.constant 0 : index
    %c0_4 = arith.constant 0 : index
    %4 = vector.load %arg4[%c0_3, %c0_4] : memref<2x256xf32, #tpu.memory_space<vmem>>, vector<2x256xf32>
    tpu.vector_store %arg4[%c0_3, %c0_4], %3 {strides = array<i32>} : memref<2x256xf32, #tpu.memory_space<vmem>>, vector<2x256xf32>,
    return
  }
  func.func @transform_0(%arg0: i32, %arg1: i32) -> (i32, i32) {
    %c0_i32 = arith.constant 0 : i32
    return %arg1, %arg0 : i32, i32
  }
  func.func @transform_1(%arg0: i32, %arg1: i32) -> (i32, i32) {
    %c0_i32 = arith.constant 0 : i32
    %c0_i32_0 = arith.constant 0 : i32
    return %c0_i32, %arg0 : i32, i32
  }
  func.func @transform_2(%arg0: i32, %arg1: i32) -> (i32, i32) {
    %c0_i32 = arith.constant 0 : i32
    return %arg1, %arg0 : i32, i32
  }
}

</mosaic_0001>

<llo_original>
// kernel: positional_encoding_forward.1
$region0: #{positional_encoding_forward.1}
  #allocation0 [shape = 'u32[]', space=smem, size = 0x4, offset = 0x4, fixed_abs, tag = 'smem constant byte address 0x4 - core index']
  #allocation1 [shape = 'u32[144,128]{1,0:T(1,128)}', space=vmem, size = 0x12000, scoped, tag = 'internal scratch']
  %s0 = inlined_call_operand.vmem [shape: f32[2,256], index: 0, kind: input, shape index: {}, may-alias: {0,2}]
  %s1 = inlined_call_operand.vmem [shape: f32[1,256], index: 1, kind: input, shape index: {}]
  %s2 = inlined_call_operand.vmem [shape: f32[2,256], index: 2, kind: output, shape index: {}, may-alias: {0,2}]
  %s3 = sld [smem:[#allocation0]]
  $region18: #{positional_encoding_forward.1} parent=0
    _
  %s5 = ssub.s32 1, %s3
  %s6 = scalar_select 0, %s5, %s3
  // Predicated region
  $region2: #{positional_encoding_forward.1} parent=0 // pred_check
    _
  $region3: #{positional_encoding_forward.1} parent=0 // pred_check_branch
    %8 = sbr.rel (0) target = $region5
  $region4: #{positional_encoding_forward.1} parent=0 // pred_region
    _
  $region5: #{positional_encoding_forward.1} parent=0 // pred_fallthru
    _
  // Predicated region
  $region6: #{positional_encoding_forward.1} parent=0 // pred_check
    _
  $region7: #{positional_encoding_forward.1} parent=0 // pred_check_branch
    %10 = sbr.rel (0) target = $region9
  $region8: #{positional_encoding_forward.1} parent=0 // pred_region
    _
  $region9: #{positional_encoding_forward.1} parent=0 // pred_fallthru
    _
  %v11 = vld [vmem:[%s0] sm:$0xf]
  %v12 = vld [vmem:[%s1] sm:$0x3]
  %v14 = vlaneseq
  %v15 = vshrl.u32 %v14, 7
  %v16 = vsub.s32 0, %v15
  %v17 = vrot.slane %v12, %v16
  %v18 = vlaneseq
  %v19 = vshrl.u32 %v18, 7
  %v20 = vsub.s32 1, %v19
  %v21 = vrot.slane %v12, %v20
  %v22 = vcombine.low %v17, %v21
  %v24 = vunpack.c.l.s4 1983009808
  %v25 = vunpack.c.0.s8 %v24
  %v26 = vlaneseq
  %v27 = vshrl.u32 %v26, 7
  %v28 = vsub.s32 %v25, %v27
  %v29 = vrot.slane %v22, %v28
  %v31 = vadd.f32 %v11, %v29
  %32 = vst [vmem:[%s2] sm:$0xf] %v31
  // Predicated region
  $region10: #{positional_encoding_forward.1} parent=0 // pred_check
    _
  $region11: #{positional_encoding_forward.1} parent=0 // pred_check_branch
    %34 = sbr.rel (0) target = $region13
  $region12: #{positional_encoding_forward.1} parent=0 // pred_region
    _
  $region13: #{positional_encoding_forward.1} parent=0 // pred_fallthru
    _
  // Predicated region
  $region14: #{positional_encoding_forward.1} parent=0 // pred_check
    _
  $region15: #{positional_encoding_forward.1} parent=0 // pred_check_branch
    %36 = sbr.rel (0) target = $region17
  $region16: #{positional_encoding_forward.1} parent=0 // pred_region
    _
  $region17: #{positional_encoding_forward.1} parent=0 // pred_fallthru
    _

</llo_original>
